<compile_context>
chip_gen: v7x
topology: tpu7x:2x2x1
jax: 0.10.0
libtpu: 0.0.40
codegen_flags: <defaults>
</compile_context>

<pallas_src>
import jax
import jax.numpy as jnp
from jax.experimental import pallas as pl
from jax.experimental.pallas import tpu as pltpu

MB, C, H, W = 8, 1, 16, 16
X_DIM = C * H * W        # 256
HID = 128
Z_DIM = 32


def vae_fwd_kernel(x_ref, eps_ref,
                   we1, be1, wezz, bezz, wd1, bd1, wdxx, bdxx,
                   xml_ref, zpack_ref):
    # ---- encoder q(z|x): bf16 MXU operands, f32 accumulation / elementwise ----
    x = x_ref[...].astype(jnp.bfloat16)
    h = jnp.tanh(
        jnp.dot(x, we1[...], preferred_element_type=jnp.float32) + be1[...])

    # fused heads: [z_mean | z_logvar] in one (HID, 2*Z_DIM) matmul
    zml = (jnp.dot(h.astype(jnp.bfloat16), wezz[...],
                   preferred_element_type=jnp.float32) + bezz[...])
    z_mean = zml[:, :Z_DIM]
    z_logvar = zml[:, Z_DIM:]

    # ---- reparametrize: z = mu + eps * exp(0.5 * logvar)  (all f32) ----
    std = jnp.exp(0.5 * z_logvar)
    z_q = z_mean + eps_ref[...] * std

    # ---- decoder p(x|z): fused [x_mean | x_logvar] head, lane-dense N = 2*X_DIM ----
    hd = jnp.tanh(
        jnp.dot(z_q.astype(jnp.bfloat16), wd1[...],
                preferred_element_type=jnp.float32) + bd1[...])
    xml = (jnp.dot(hd.astype(jnp.bfloat16), wdxx[...],
                   preferred_element_type=jnp.float32) + bdxx[...])

    # lane-dense stores: (MB, 512) and (MB, 128) -> unmasked vst, 2 output DMAs
    xml_ref[...] = xml
    zpack_ref[...] = jnp.concatenate(
        [z_q, zml, jnp.zeros_like(z_q)], axis=-1)   # [z_q | z_mean | z_logvar | pad]


def init_params(key):
    """Deterministic synthetic parameters (Xavier-ish scaling); bf16 weights, f32 biases."""
    ks = jax.random.split(key, 6)

    def lin(k, fan_in, fan_out):
        w = (jax.random.normal(k, (fan_in, fan_out), jnp.float32)
             / jnp.sqrt(jnp.float32(fan_in))).astype(jnp.bfloat16)
        b = jnp.zeros((1, fan_out), jnp.float32)
        return w, b

    we1, be1 = lin(ks[0], X_DIM, HID)
    wem, bem = lin(ks[1], HID, Z_DIM)
    wev, bev = lin(ks[2], HID, Z_DIM)
    wd1, bd1 = lin(ks[3], Z_DIM, HID)
    wdm, bdm = lin(ks[4], HID, X_DIM)
    wdv, bdv = lin(ks[5], HID, X_DIM)

    # fuse the paired mean/logvar heads into single wide weights/biases
    wezz = jnp.concatenate([wem, wev], axis=1)   # (HID, 2*Z_DIM)  = (128, 64)
    bezz = jnp.concatenate([bem, bev], axis=1)   # (1, 64)
    wdxx = jnp.concatenate([wdm, wdv], axis=1)   # (HID, 2*X_DIM)  = (128, 512)
    bdxx = jnp.concatenate([bdm, bdv], axis=1)   # (1, 512)
    return (we1, be1, wezz, bezz, wd1, bd1, wdxx, bdxx)


def vae_forward(x_nchw, eps, params):
    mb = x_nchw.shape[0]
    x_flat = x_nchw.reshape(mb, -1).astype(jnp.float32)  # glue: torch .view(MB, -1)

    vmem = pl.BlockSpec(memory_space=pltpu.MemorySpace.VMEM)
    n_inputs = 2 + len(params)

    out_shape = (
        jax.ShapeDtypeStruct((mb, 2 * X_DIM), jnp.float32),   # [x_mean | x_logvar]
        jax.ShapeDtypeStruct((mb, 4 * Z_DIM), jnp.float32),   # [z_q | z_mean | z_logvar | pad]
    )

    fn = pl.pallas_call(
        vae_fwd_kernel,
        out_shape=out_shape,
        in_specs=[vmem] * n_inputs,
        out_specs=(vmem, vmem),
    )
    xml, zpack = fn(x_flat, eps, *params)

    # split the packed, lane-dense slabs back into the 5 VAE.forward outputs
    x_mean = xml[:, :X_DIM]
    x_logvar = xml[:, X_DIM:]
    z_q = zpack[:, :Z_DIM]
    z_mean = zpack[:, Z_DIM:2 * Z_DIM]
    z_logvar = zpack[:, 2 * Z_DIM:3 * Z_DIM]
    return x_mean, x_logvar, z_q, z_mean, z_logvar


def vae_forward_ref(x_nchw, eps, params):
    """Pure-JAX reference of the same forward (bf16 matmuls, f32 accumulation)."""
    we1, be1, wezz, bezz, wd1, bd1, wdxx, bdxx = params
    x = x_nchw.reshape(x_nchw.shape[0], -1).astype(jnp.bfloat16)
    h = jnp.tanh(jnp.dot(x, we1, preferred_element_type=jnp.float32) + be1)
    zml = jnp.dot(h.astype(jnp.bfloat16), wezz,
                  preferred_element_type=jnp.float32) + bezz
    z_mean = zml[:, :Z_DIM]
    z_logvar = zml[:, Z_DIM:]
    z_q = z_mean + eps * jnp.exp(0.5 * z_logvar)
    hd = jnp.tanh(jnp.dot(z_q.astype(jnp.bfloat16), wd1,
                          preferred_element_type=jnp.float32) + bd1)
    xml = jnp.dot(hd.astype(jnp.bfloat16), wdxx,
                  preferred_element_type=jnp.float32) + bdxx
    return xml[:, :X_DIM], xml[:, X_DIM:], z_q, z_mean, z_logvar


if __name__ == "__main__":
    key = jax.random.PRNGKey(0)
    kx, keps, kp = jax.random.split(key, 3)

    x = jax.random.normal(kx, (MB, C, H, W), jnp.float32)    # NCHW image input
    eps = jax.random.normal(keps, (MB, Z_DIM), jnp.float32)  # reparam noise
    params = init_params(kp)

    outs = vae_forward(x, eps, params)
    outs = jax.block_until_ready(outs)

    refs = vae_forward_ref(x, eps, params)
    for o, r in zip(outs, refs):
        assert o.shape == r.shape
        # bf16 MXU operands -> tolerance appropriate for bf16 matmul inputs
        assert jnp.allclose(o, r, atol=1e-2, rtol=1e-2)

    print("KERNEL_OK")
</pallas_src>

<mosaic_0001>
module attributes {stable_mosaic.version = 11 : i64} {
  func.func @vae_fwd_kernel(%arg0: memref<8x256xf32, #tpu.memory_space<vmem>>, %arg1: memref<8x32xf32, #tpu.memory_space<vmem>>, %arg2: memref<256x128xbf16, #tpu.memory_space<vmem>>, %arg3: memref<1x128xf32, #tpu.memory_space<vmem>>, %arg4: memref<128x64xbf16, #tpu.memory_space<vmem>>, %arg5: memref<1x64xf32, #tpu.memory_space<vmem>>, %arg6: memref<32x128xbf16, #tpu.memory_space<vmem>>, %arg7: memref<1x128xf32, #tpu.memory_space<vmem>>, %arg8: memref<128x512xbf16, #tpu.memory_space<vmem>>, %arg9: memref<1x512xf32, #tpu.memory_space<vmem>>, %arg10: memref<8x512xf32, #tpu.memory_space<vmem>>, %arg11: memref<8x128xf32, #tpu.memory_space<vmem>>) attributes {dimension_semantics = [], scalar_prefetch = 0 : i64, scratch_operands = 0 : i64, tpu.core_type = #tpu.core_type<tc>} {
    %c0 = arith.constant 0 : index
    %c0_0 = arith.constant 0 : index
    %0 = vector.load %arg0[%c0, %c0_0] : memref<8x256xf32, #tpu.memory_space<vmem>>, vector<8x256xf32>
    %1 = arith.truncf %0 : vector<8x256xf32> to vector<8x256xbf16>
    %c0_1 = arith.constant 0 : index
    %c0_2 = arith.constant 0 : index
    %2 = vector.load %arg2[%c0_1, %c0_2] : memref<256x128xbf16, #tpu.memory_space<vmem>>, vector<256x128xbf16>
    %cst = arith.constant dense<0.000000e+00> : vector<8x128xf32>
    %3 = tpu.matmul %1, %2, %cst {dimension_numbers = #tpu.dot_dimension_numbers<[1], [0], [0], [1], [0, 0, 1, 1], [], []>} : vector<8x256xbf16>, vector<256x128xbf16>, vector<8x128xf32> -> vector<8x128xf32>
    %c0_3 = arith.constant 0 : index
    %c0_4 = arith.constant 0 : index
    %4 = vector.load %arg3[%c0_3, %c0_4] : memref<1x128xf32, #tpu.memory_space<vmem>>, vector<1x128xf32>
    %5 = vector.broadcast %4 : vector<1x128xf32> to vector<8x128xf32>
    %6 = arith.addf %3, %5 : vector<8x128xf32>
    %7 = math.tanh %6 : vector<8x128xf32>
    %8 = arith.truncf %7 : vector<8x128xf32> to vector<8x128xbf16>
    %c0_5 = arith.constant 0 : index
    %c0_6 = arith.constant 0 : index
    %9 = vector.load %arg4[%c0_5, %c0_6] : memref<128x64xbf16, #tpu.memory_space<vmem>>, vector<128x64xbf16>
    %cst_7 = arith.constant dense<0.000000e+00> : vector<8x64xf32>
    %10 = tpu.matmul %8, %9, %cst_7 {dimension_numbers = #tpu.dot_dimension_numbers<[1], [0], [0], [1], [0, 0, 1, 1], [], []>} : vector<8x128xbf16>, vector<128x64xbf16>, vector<8x64xf32> -> vector<8x64xf32>
    %c0_8 = arith.constant 0 : index
    %c0_9 = arith.constant 0 : index
    %11 = vector.load %arg5[%c0_8, %c0_9] : memref<1x64xf32, #tpu.memory_space<vmem>>, vector<1x64xf32>
    %12 = vector.broadcast %11 : vector<1x64xf32> to vector<8x64xf32>
    %13 = arith.addf %10, %12 : vector<8x64xf32>
    %14 = vector.extract_strided_slice %13 {offsets = [0, 0], sizes = [8, 32], strides = [1, 1]} : vector<8x64xf32> to vector<8x32xf32>
    %15 = vector.extract_strided_slice %13 {offsets = [0, 32], sizes = [8, 32], strides = [1, 1]} : vector<8x64xf32> to vector<8x32xf32>
    %cst_10 = arith.constant 5.000000e-01 : f32
    %16 = vector.broadcast %cst_10 : f32 to vector<8x32xf32>
    %17 = arith.mulf %16, %15 : vector<8x32xf32>
    %18 = math.exp %17 : vector<8x32xf32>
    %c0_11 = arith.constant 0 : index
    %c0_12 = arith.constant 0 : index
    %19 = vector.load %arg1[%c0_11, %c0_12] : memref<8x32xf32, #tpu.memory_space<vmem>>, vector<8x32xf32>
    %20 = arith.mulf %19, %18 : vector<8x32xf32>
    %21 = arith.addf %14, %20 : vector<8x32xf32>
    %22 = arith.truncf %21 : vector<8x32xf32> to vector<8x32xbf16>
    %c0_13 = arith.constant 0 : index
    %c0_14 = arith.constant 0 : index
    %23 = vector.load %arg6[%c0_13, %c0_14] : memref<32x128xbf16, #tpu.memory_space<vmem>>, vector<32x128xbf16>
    %cst_15 = arith.constant dense<0.000000e+00> : vector<8x128xf32>
    %24 = tpu.matmul %22, %23, %cst_15 {dimension_numbers = #tpu.dot_dimension_numbers<[1], [0], [0], [1], [0, 0, 1, 1], [], []>} : vector<8x32xbf16>, vector<32x128xbf16>, vector<8x128xf32> -> vector<8x128xf32>
    %c0_16 = arith.constant 0 : index
    %c0_17 = arith.constant 0 : index
    %25 = vector.load %arg7[%c0_16, %c0_17] : memref<1x128xf32, #tpu.memory_space<vmem>>, vector<1x128xf32>
    %26 = vector.broadcast %25 : vector<1x128xf32> to vector<8x128xf32>
    %27 = arith.addf %24, %26 : vector<8x128xf32>
    %28 = math.tanh %27 : vector<8x128xf32>
    %29 = arith.truncf %28 : vector<8x128xf32> to vector<8x128xbf16>
    %c0_18 = arith.constant 0 : index
    %c0_19 = arith.constant 0 : index
    %30 = vector.load %arg8[%c0_18, %c0_19] : memref<128x512xbf16, #tpu.memory_space<vmem>>, vector<128x512xbf16>
    %cst_20 = arith.constant dense<0.000000e+00> : vector<8x512xf32>
    %31 = tpu.matmul %29, %30, %cst_20 {dimension_numbers = #tpu.dot_dimension_numbers<[1], [0], [0], [1], [0, 0, 1, 1], [], []>} : vector<8x128xbf16>, vector<128x512xbf16>, vector<8x512xf32> -> vector<8x512xf32>
    %c0_21 = arith.constant 0 : index
    %c0_22 = arith.constant 0 : index
    %32 = vector.load %arg9[%c0_21, %c0_22] : memref<1x512xf32, #tpu.memory_space<vmem>>, vector<1x512xf32>
    %33 = vector.broadcast %32 : vector<1x512xf32> to vector<8x512xf32>
    %34 = arith.addf %31, %33 : vector<8x512xf32>
    %c0_23 = arith.constant 0 : index
    %c0_24 = arith.constant 0 : index
    %35 = vector.load %arg10[%c0_23, %c0_24] : memref<8x512xf32, #tpu.memory_space<vmem>>, vector<8x512xf32>
    tpu.vector_store %arg10[%c0_23, %c0_24], %34 {strides = array<i32>} : memref<8x512xf32, #tpu.memory_space<vmem>>, vector<8x512xf32>,
    %cst_25 = arith.constant 0.000000e+00 : f32
    %36 = vector.broadcast %cst_25 : f32 to vector<8x32xf32>
    %37 = tpu.concatenate %21, %13, %36 in 1 : vector<8x32xf32>, vector<8x64xf32>, vector<8x32xf32> -> vector<8x128xf32>
    %c0_26 = arith.constant 0 : index
    %c0_27 = arith.constant 0 : index
    %38 = vector.load %arg11[%c0_26, %c0_27] : memref<8x128xf32, #tpu.memory_space<vmem>>, vector<8x128xf32>
    tpu.vector_store %arg11[%c0_26, %c0_27], %37 {strides = array<i32>} : memref<8x128xf32, #tpu.memory_space<vmem>>, vector<8x128xf32>,
    return
  }
}

</mosaic_0001>

<llo_original>
// kernel: tpu_custom_call.1
$region0: #{tpu_custom_call.1}
  #allocation0 [shape = 'u32[]', space=smem, size = 0x4, offset = 0x4, fixed_abs, tag = 'smem constant byte address 0x4 - core index']
  #allocation1 [shape = 'u32[144,128]{1,0:T(1,128)}', space=vmem, size = 0x12000, scoped, tag = 'internal scratch']
  %s0 = inlined_call_operand.vmem [shape: f32[8,256], index: 0, kind: input, shape index: {}]
  %s1 = inlined_call_operand.vmem [shape: f32[8,32], index: 1, kind: input, shape index: {}]
  %s2 = inlined_call_operand.hbm [shape: bf16[256,128], index: 2, kind: input, shape index: {}]
  %s3 = inlined_call_operand.vmem [shape: f32[1,128], index: 3, kind: input, shape index: {}]
  %s4 = inlined_call_operand.vmem [shape: bf16[128,64], index: 4, kind: input, shape index: {}]
  %s5 = inlined_call_operand.vmem [shape: f32[1,64], index: 5, kind: input, shape index: {}]
  %s6 = inlined_call_operand.vmem [shape: bf16[32,128], index: 6, kind: input, shape index: {}]
  %s7 = inlined_call_operand.vmem [shape: f32[1,128], index: 7, kind: input, shape index: {}]
  %s8 = inlined_call_operand.hbm [shape: bf16[128,512], index: 8, kind: input, shape index: {}]
  %s9 = inlined_call_operand.vmem [shape: f32[1,512], index: 9, kind: input, shape index: {}]
  %s10 = inlined_call_operand.hbm [shape: f32[8,512], index: 10, kind: output, shape index: {0}]
  %s11 = inlined_call_operand.hbm [shape: f32[8,128], index: 11, kind: output, shape index: {1}]
  %12 = xla_tuple %s10, %s11
  %s13 = sld [smem:[#allocation0]]
  $region66: #{tpu_custom_call.1} parent=0
    _
  %s15 = ssub.s32 1, %s13
  %s16 = scalar_select 0, %s15, %s13
  $region1: #{tpu_custom_call.1} parent=0
    #allocation2 [shape = 'u8[65536]{0}', space=vmem, size = 0x10000, scoped, tag = 'input window, operand 2, single buffered']
    #allocation3 [shape = 's32[1]{0}', space=sflag, size = 0x4, scoped, tag = 'scoped memory for tpu_custom_call.1']
    #allocation4 [shape = 's32[1]{0}', space=sflag, size = 0x4, scoped, tag = 'scoped memory for tpu_custom_call.1']
    #allocation5 [shape = 'u8[131072]{0}', space=vmem, size = 0x20000, scoped, tag = 'input window, operand 8, single buffered']
    #allocation6 [shape = 's32[1]{0}', space=sflag, size = 0x4, scoped, tag = 'scoped memory for tpu_custom_call.1']
    #allocation7 [shape = 'u8[16384]{0}', space=vmem, size = 0x4000, scoped, tag = 'output window, operand 0, single buffered']
    #allocation8 [shape = 'u8[4096]{0}', space=vmem, size = 0x1000, scoped, tag = 'output window, operand 1, single buffered']
    #allocation9 [shape = 's32[1]{0}', space=sflag, size = 0x4, scoped, tag = 'scoped memory for tpu_custom_call.1']
    %17 = vsyncpa [#allocation3], 0
    %18 = vsyncpa [#allocation6], 0
    %19 = vsyncpa [#allocation4], 0
    %20 = vsyncpa [#allocation9], 0
    // Predicated region
    $region2: #{tpu_custom_call.1} parent=1 // pred_check
      _
    $region3: #{tpu_custom_call.1} parent=1 // pred_check_branch
      %22 = sbr.rel (0) target = $region5
    $region4: #{tpu_custom_call.1} parent=1 // pred_region
      _
    $region5: #{tpu_custom_call.1} parent=1 // pred_fallthru
      _
    // Predicated region
    $region6: #{tpu_custom_call.1} parent=1 // pred_check
      _
    $region7: #{tpu_custom_call.1} parent=1 // pred_check_branch
      %24 = sbr.rel (0) target = $region9
    $region8: #{tpu_custom_call.1} parent=1 // pred_region
      _
    $region9: #{tpu_custom_call.1} parent=1 // pred_fallthru
      _
    // Predicated region
    $region10: #{tpu_custom_call.1} parent=1 // pred_check
      _
    $region11: #{tpu_custom_call.1} parent=1 // pred_check_branch
      %26 = sbr.rel (0) target = $region13
    $region12: #{tpu_custom_call.1} parent=1 // pred_region
      %s28 = ssub.s32 2048, 2048
      %29 = vsyncadd [#allocation3], %s28
      %s30 = sshll.u32 [#allocation2], 4
      %s31 = int_to_ptr.vmem [resolvable:$true] %s30
      %36 = dma.hbm_to_vmem [thread:$0]  %s2, 2048, %s31, [#allocation3], 64, 64, 4
    $region13: #{tpu_custom_call.1} parent=1 // pred_fallthru
      _
    // Predicated region
    $region14: #{tpu_custom_call.1} parent=1 // pred_check
      _
    $region15: #{tpu_custom_call.1} parent=1 // pred_check_branch
      %38 = sbr.rel (0) target = $region17
    $region16: #{tpu_custom_call.1} parent=1 // pred_region
      _
    $region17: #{tpu_custom_call.1} parent=1 // pred_fallthru
      _
    // Predicated region
    $region18: #{tpu_custom_call.1} parent=1 // pred_check
      _
    $region19: #{tpu_custom_call.1} parent=1 // pred_check_branch
      %40 = sbr.rel (0) target = $region21
    $region20: #{tpu_custom_call.1} parent=1 // pred_region
      _
    $region21: #{tpu_custom_call.1} parent=1 // pred_fallthru
      _
    // Predicated region
    $region22: #{tpu_custom_call.1} parent=1 // pred_check
      _
    $region23: #{tpu_custom_call.1} parent=1 // pred_check_branch
      %42 = sbr.rel (0) target = $region25
    $region24: #{tpu_custom_call.1} parent=1 // pred_region
      _
    $region25: #{tpu_custom_call.1} parent=1 // pred_fallthru
      _
    // Predicated region
    $region26: #{tpu_custom_call.1} parent=1 // pred_check
      _
    $region27: #{tpu_custom_call.1} parent=1 // pred_check_branch
      %44 = sbr.rel (0) target = $region29
    $region28: #{tpu_custom_call.1} parent=1 // pred_region
      _
    $region29: #{tpu_custom_call.1} parent=1 // pred_fallthru
      _
    // Predicated region
    $region30: #{tpu_custom_call.1} parent=1 // pred_check
      _
    $region31: #{tpu_custom_call.1} parent=1 // pred_check_branch
      %46 = sbr.rel (0) target = $region33
    $region32: #{tpu_custom_call.1} parent=1 // pred_region
      _
    $region33: #{tpu_custom_call.1} parent=1 // pred_fallthru
      _
    // Predicated region
    $region34: #{tpu_custom_call.1} parent=1 // pred_check
      _
    $region35: #{tpu_custom_call.1} parent=1 // pred_check_branch
      %48 = sbr.rel (0) target = $region37
    $region36: #{tpu_custom_call.1} parent=1 // pred_region
      %s50 = ssub.s32 4096, 4096
      %51 = vsyncadd [#allocation6], %s50
      %s52 = sshll.u32 [#allocation5], 4
      %s53 = int_to_ptr.vmem [resolvable:$true] %s52
      %58 = dma.hbm_to_vmem [thread:$0]  %s8, 4096, %s53, [#allocation6], 256, 256, 16
    $region37: #{tpu_custom_call.1} parent=1 // pred_fallthru
      _
    // Predicated region
    $region38: #{tpu_custom_call.1} parent=1 // pred_check
      _
    $region39: #{tpu_custom_call.1} parent=1 // pred_check_branch
      %60 = sbr.rel (0) target = $region41
    $region40: #{tpu_custom_call.1} parent=1 // pred_region
      _
    $region41: #{tpu_custom_call.1} parent=1 // pred_fallthru
      _
    // Predicated region
    $region42: #{tpu_custom_call.1} parent=1 // pred_check
      _
    $region43: #{tpu_custom_call.1} parent=1 // pred_check_branch
      %62 = sbr.rel (0) target = $region45
    $region44: #{tpu_custom_call.1} parent=1 // pred_region
      %63 = dma.done [#allocation3], 2048
    $region45: #{tpu_custom_call.1} parent=1 // pred_fallthru
      _
    // Predicated region
    $region46: #{tpu_custom_call.1} parent=1 // pred_check
      _
    $region47: #{tpu_custom_call.1} parent=1 // pred_check_branch
      %65 = sbr.rel (0) target = $region49
    $region48: #{tpu_custom_call.1} parent=1 // pred_region
      %66 = dma.done [#allocation6], 4096
    $region49: #{tpu_custom_call.1} parent=1 // pred_fallthru
      _
    %v68 = vld [vmem:[%s0] sm:$0xff]
    %v69 = vld [vmem:[%s0 + $0x8] sm:$0xff]
    %v70 = vpack.c.bf16 %v68, %v68
    %v71 = vpack.c.bf16 %v69, %v69
    %v72 = vld [vmem:[#allocation2] sm:$0xf]
    %v73 = vld [vmem:[#allocation2 + $0x4] sm:$0xf]
    %v74 = vld [vmem:[#allocation2 + $0x8] sm:$0xf]
    %v75 = vld [vmem:[#allocation2 + $0xc] sm:$0xf]
    %v76 = vld [vmem:[#allocation2 + $0x10] sm:$0xf]
    %v77 = vld [vmem:[#allocation2 + $0x14] sm:$0xf]
    %v78 = vld [vmem:[#allocation2 + $0x18] sm:$0xf]
    %v79 = vld [vmem:[#allocation2 + $0x1c] sm:$0xf]
    %v80 = vld [vmem:[#allocation2 + $0x20] sm:$0xf]
    %v81 = vld [vmem:[#allocation2 + $0x24] sm:$0xf]
    %v82 = vld [vmem:[#allocation2 + $0x28] sm:$0xf]
    %v83 = vld [vmem:[#allocation2 + $0x2c] sm:$0xf]
    %v84 = vld [vmem:[#allocation2 + $0x30] sm:$0xf]
    %v85 = vld [vmem:[#allocation2 + $0x34] sm:$0xf]
    %v86 = vld [vmem:[#allocation2 + $0x38] sm:$0xf]
    %v87 = vld [vmem:[#allocation2 + $0x3c] sm:$0xf]
    %v88 = vld [vmem:[#allocation2 + $0x40] sm:$0xf]
    %v89 = vld [vmem:[#allocation2 + $0x44] sm:$0xf]
    %v90 = vld [vmem:[#allocation2 + $0x48] sm:$0xf]
    %v91 = vld [vmem:[#allocation2 + $0x4c] sm:$0xf]
    %v92 = vld [vmem:[#allocation2 + $0x50] sm:$0xf]
    %v93 = vld [vmem:[#allocation2 + $0x54] sm:$0xf]
    %v94 = vld [vmem:[#allocation2 + $0x58] sm:$0xf]
    %v95 = vld [vmem:[#allocation2 + $0x5c] sm:$0xf]
    %v96 = vld [vmem:[#allocation2 + $0x60] sm:$0xf]
    %v97 = vld [vmem:[#allocation2 + $0x64] sm:$0xf]
    %v98 = vld [vmem:[#allocation2 + $0x68] sm:$0xf]
    %v99 = vld [vmem:[#allocation2 + $0x6c] sm:$0xf]
    %v100 = vld [vmem:[#allocation2 + $0x70] sm:$0xf]
    %v101 = vld [vmem:[#allocation2 + $0x74] sm:$0xf]
    %v102 = vld [vmem:[#allocation2 + $0x78] sm:$0xf]
    %v103 = vld [vmem:[#allocation2 + $0x7c] sm:$0xf]
    %v104 = vld [vmem:[%s3] sm:$0x1]
    %v106 = vlaneseq
    %v107 = vshrl.u32 %v106, 7
    %v108 = vsub.s32 0, %v107
    %v109 = vrot.slane %v104, %v108
    %v143 = vunpack.c.l.b16 %v72
    %v144 = vunpack.c.l.b16 %v73
    %v145 = vunpack.c.l.b16 %v74
    %v146 = vunpack.c.l.b16 %v75
    %v147 = vunpack.c.l.b16 %v76
    %v148 = vunpack.c.l.b16 %v77
    %v149 = vunpack.c.l.b16 %v78
    %v150 = vunpack.c.l.b16 %v79
    %v151 = vunpack.c.l.b16 %v80
    %v152 = vunpack.c.l.b16 %v81
    %v153 = vunpack.c.l.b16 %v82
    %v154 = vunpack.c.l.b16 %v83
    %v155 = vunpack.c.l.b16 %v84
    %v156 = vunpack.c.l.b16 %v85
    %v157 = vunpack.c.l.b16 %v86
    %v158 = vunpack.c.l.b16 %v87
    %v159 = vunpack.c.l.b16 %v88
    %v160 = vunpack.c.l.b16 %v89
    %v161 = vunpack.c.l.b16 %v90
    %v162 = vunpack.c.l.b16 %v91
    %v163 = vunpack.c.l.b16 %v92
    %v164 = vunpack.c.l.b16 %v93
    %v165 = vunpack.c.l.b16 %v94
    %v166 = vunpack.c.l.b16 %v95
    %v167 = vunpack.c.l.b16 %v96
    %v168 = vunpack.c.l.b16 %v97
    %v169 = vunpack.c.l.b16 %v98
    %v170 = vunpack.c.l.b16 %v99
    %v171 = vunpack.c.l.b16 %v100
    %v172 = vunpack.c.l.b16 %v101
    %v173 = vunpack.c.l.b16 %v102
    %v174 = vunpack.c.l.b16 %v103
    %v175 = vpack.c.b16 %v144, %v143
    %v176 = vpack.c.b16 %v146, %v145
    %v177 = vpack.c.b16 %v148, %v147
    %v178 = vpack.c.b16 %v150, %v149
    %v179 = vpack.c.b16 %v152, %v151
    %v180 = vpack.c.b16 %v154, %v153
    %v181 = vpack.c.b16 %v156, %v155
    %v182 = vpack.c.b16 %v158, %v157
    %v183 = vpack.c.b16 %v160, %v159
    %v184 = vpack.c.b16 %v162, %v161
    %v185 = vpack.c.b16 %v164, %v163
    %v186 = vpack.c.b16 %v166, %v165
    %v187 = vpack.c.b16 %v168, %v167
    %v188 = vpack.c.b16 %v170, %v169
    %v189 = vpack.c.b16 %v172, %v171
    %v190 = vpack.c.b16 %v174, %v173
    %207 = vmatprep.subr.bf16.mxu0 0
    %208 = vmatpush1.bf16.msra.mxu0 %v175
    %209 = vmatprep.subr.bf16.mxu0 0
    %210 = vmatpush1.bf16.msra.mxu0 %v176
    %211 = vmatprep.subr.bf16.mxu0 0
    %212 = vmatpush1.bf16.msra.mxu0 %v177
    %213 = vmatprep.subr.bf16.mxu0 0
    %214 = vmatpush1.bf16.msra.mxu0 %v178
    %215 = vmatprep.subr.bf16.mxu0 0
    %216 = vmatpush1.bf16.msra.mxu0 %v179
    %217 = vmatprep.subr.bf16.mxu0 0
    %218 = vmatpush1.bf16.msra.mxu0 %v180
    %219 = vmatprep.subr.bf16.mxu0 0
    %220 = vmatpush1.bf16.msra.mxu0 %v181
    %221 = vmatprep.subr.bf16.mxu0 0
    %222 = vmatpush1.bf16.msra.mxu0 %v182
    %223 = vmatprep.subr.bf16.mxu0 0
    %224 = vmatpush1.bf16.msra.mxu0 %v183
    %225 = vmatprep.subr.bf16.mxu0 0
    %226 = vmatpush1.bf16.msra.mxu0 %v184
    %227 = vmatprep.subr.bf16.mxu0 0
    %228 = vmatpush1.bf16.msra.mxu0 %v185
    %229 = vmatprep.subr.bf16.mxu0 0
    %230 = vmatpush1.bf16.msra.mxu0 %v186
    %231 = vmatprep.subr.bf16.mxu0 0
    %232 = vmatpush1.bf16.msra.mxu0 %v187
    %233 = vmatprep.subr.bf16.mxu0 0
    %234 = vmatpush1.bf16.msra.mxu0 %v188
    %235 = vmatprep.subr.bf16.mxu0 0
    %236 = vmatpush1.bf16.msra.mxu0 %v189
    %237 = vmatprep.subr.bf16.mxu0 0
    %238 = vmatpush1.bf16.msra.mxu0 %v190
    %239 = vmatprep.mubr.bf16.mxu0 %v71
    %240 = vmatmul.mubr.bf16.gmra.mrb[0].mxu0 %v70
    %v241 = vpop.f32.mrb[0].mxu0
    %v242 = vadd.f32 %v109, %v241
    %v243 = vpop.f32.mrb[0].mxu0
    %v244 = vpop.f32.mrb[0].mxu0
    %v245 = vpop.f32.mrb[0].mxu0
    %246 = vdwg.mxu0
    %v247 = vtanh.pop %v242
    %v248 = vpack.c.bf16 %v247, %v247
    %v249 = vld [vmem:[%s4] sm:$0xf]
    %v250 = vld [vmem:[%s4 + $0x4] sm:$0xf]
    %v251 = vld [vmem:[%s4 + $0x8] sm:$0xf]
    %v252 = vld [vmem:[%s4 + $0xc] sm:$0xf]
    %v253 = vld [vmem:[%s4 + $0x10] sm:$0xf]
    %v254 = vld [vmem:[%s4 + $0x14] sm:$0xf]
    %v255 = vld [vmem:[%s4 + $0x18] sm:$0xf]
    %v256 = vld [vmem:[%s4 + $0x1c] sm:$0xf]
    %v257 = vld [vmem:[%s4 + $0x20] sm:$0xf]
    %v258 = vld [vmem:[%s4 + $0x24] sm:$0xf]
    %v259 = vld [vmem:[%s4 + $0x28] sm:$0xf]
    %v260 = vld [vmem:[%s4 + $0x2c] sm:$0xf]
    %v261 = vld [vmem:[%s4 + $0x30] sm:$0xf]
    %v262 = vld [vmem:[%s4 + $0x34] sm:$0xf]
    %v263 = vld [vmem:[%s4 + $0x38] sm:$0xf]
    %v264 = vld [vmem:[%s4 + $0x3c] sm:$0xf]
    %v265 = vld [vmem:[%s5] sm:$0x1]
    %v267 = vlaneseq
    %v268 = vshrl.u32 %v267, 7
    %v269 = vsub.s32 0, %v268
    %v270 = vrot.slane %v265, %v269
    %v288 = vunpack.c.l.b16 %v249
    %v289 = vunpack.c.l.b16 %v250
    %v290 = vunpack.c.l.b16 %v251
    %v291 = vunpack.c.l.b16 %v252
    %v292 = vunpack.c.l.b16 %v253
    %v293 = vunpack.c.l.b16 %v254
    %v294 = vunpack.c.l.b16 %v255
    %v295 = vunpack.c.l.b16 %v256
    %v296 = vunpack.c.l.b16 %v257
    %v297 = vunpack.c.l.b16 %v258
    %v298 = vunpack.c.l.b16 %v259
    %v299 = vunpack.c.l.b16 %v260
    %v300 = vunpack.c.l.b16 %v261
    %v301 = vunpack.c.l.b16 %v262
    %v302 = vunpack.c.l.b16 %v263
    %v303 = vunpack.c.l.b16 %v264
    %v304 = vpack.c.b16 %v289, %v288
    %v305 = vpack.c.b16 %v291, %v290
    %v306 = vpack.c.b16 %v293, %v292
    %v307 = vpack.c.b16 %v295, %v294
    %v308 = vpack.c.b16 %v297, %v296
    %v309 = vpack.c.b16 %v299, %v298
    %v310 = vpack.c.b16 %v301, %v300
    %v311 = vpack.c.b16 %v303, %v302
    %320 = vmatprep.subr.bf16.mxu0 0
    %321 = vmatpush1.bf16.msra.mxu0 %v304
    %322 = vmatprep.subr.bf16.mxu0 0
    %323 = vmatpush1.bf16.msra.mxu0 %v305
    %324 = vmatprep.subr.bf16.mxu0 0
    %325 = vmatpush1.bf16.msra.mxu0 %v306
    %326 = vmatprep.subr.bf16.mxu0 0
    %327 = vmatpush1.bf16.msra.mxu0 %v307
    %328 = vmatprep.subr.bf16.mxu0 0
    %329 = vmatpush1.bf16.msra.mxu0 %v308
    %330 = vmatprep.subr.bf16.mxu0 0
    %331 = vmatpush1.bf16.msra.mxu0 %v309
    %332 = vmatprep.subr.bf16.mxu0 0
    %333 = vmatpush1.bf16.msra.mxu0 %v310
    %334 = vmatprep.subr.bf16.mxu0 0
    %335 = vmatpush1.bf16.msra.mxu0 %v311
    %336 = vmatprep.subr.bf16.mxu0 0
    %337 = vmatpush1.bf16.msra.mxu0 0
    %338 = vmatprep.subr.bf16.mxu0 0
    %339 = vmatpush1.bf16.msra.mxu0 0
    %340 = vmatprep.subr.bf16.mxu0 0
    %341 = vmatpush1.bf16.msra.mxu0 0
    %342 = vmatprep.subr.bf16.mxu0 0
    %343 = vmatpush1.bf16.msra.mxu0 0
    %344 = vmatprep.subr.bf16.mxu0 0
    %345 = vmatpush1.bf16.msra.mxu0 0
    %346 = vmatprep.subr.bf16.mxu0 0
    %347 = vmatpush1.bf16.msra.mxu0 0
    %348 = vmatprep.subr.bf16.mxu0 0
    %349 = vmatpush1.bf16.msra.mxu0 0
    %350 = vmatprep.subr.bf16.mxu0 0
    %351 = vmatpush1.bf16.msra.mxu0 0
    %352 = vmatprep.mubr.bf16.mxu0 0
    %353 = vmatmul.mubr.bf16.gmra.mrb[0].mxu0 %v248
    %v354 = vpop.f32.mrb[0].mxu0
    %v355 = vadd.f32 %v270, %v354
    %v356 = vpop.f32.mrb[0].mxu0
    %v357 = vpop.f32.mrb[0].mxu0
    %v358 = vpop.f32.mrb[0].mxu0
    %359 = vdwg.mxu0
    %v360 = vmul.f32 %v355, 0.5
    %v361 = vmul.f32 %v360, 1.442695
    %v362 = vpow.pop %v361
    %v363 = vld [vmem:[%s1] sm:$0xff]
    %365 = vrot.lane.b32.xlu0 %v362, 96
    %v366 = vpop.permute.xlu0 %365
    %v368 = vmul.f32 %v363, %v366
    %v369 = vadd.f32 %v355, %v368
    %v370 = vpack.c.bf16 %v369, %v369
    %v371 = vld [vmem:[%s6] sm:$0xf]
    %v372 = vld [vmem:[%s6 + $0x4] sm:$0xf]
    %v373 = vld [vmem:[%s6 + $0x8] sm:$0xf]
    %v374 = vld [vmem:[%s6 + $0xc] sm:$0xf]
    %v375 = vld [vmem:[%s7] sm:$0x1]
    %v377 = vlaneseq
    %v378 = vshrl.u32 %v377, 7
    %v379 = vsub.s32 0, %v378
    %v380 = vrot.slane %v375, %v379
    %v386 = vunpack.c.l.b16 %v371
    %v387 = vunpack.c.l.b16 %v372
    %v388 = vunpack.c.l.b16 %v373
    %v389 = vunpack.c.l.b16 %v374
    %v390 = vpack.c.b16 %v387, %v386
    %v391 = vpack.c.b16 %v389, %v388
    %vm394 = vcmask 261120
    %v396 = vsel %vm394, %v370, 0
    %398 = vmatprep.subr.bf16.mxu0 0
    %399 = vmatpush1.bf16.msra.mxu0 %v390
    %400 = vmatprep.subr.bf16.mxu0 0
    %401 = vmatpush1.bf16.msra.mxu0 %v391
    %402 = vmatprep.subr.bf16.mxu0 0
    %403 = vmatpush1.bf16.msra.mxu0 0
    %404 = vmatprep.subr.bf16.mxu0 0
    %405 = vmatpush1.bf16.msra.mxu0 0
    %406 = vmatprep.subr.bf16.mxu0 0
    %407 = vmatpush1.bf16.msra.mxu0 0
    %408 = vmatprep.subr.bf16.mxu0 0
    %409 = vmatpush1.bf16.msra.mxu0 0
    %410 = vmatprep.subr.bf16.mxu0 0
    %411 = vmatpush1.bf16.msra.mxu0 0
    %412 = vmatprep.subr.bf16.mxu0 0
    %413 = vmatpush1.bf16.msra.mxu0 0
    %414 = vmatprep.subr.bf16.mxu0 0
    %415 = vmatpush1.bf16.msra.mxu0 0
    %416 = vmatprep.subr.bf16.mxu0 0
    %417 = vmatpush1.bf16.msra.mxu0 0
    %418 = vmatprep.subr.bf16.mxu0 0
    %419 = vmatpush1.bf16.msra.mxu0 0
    %420 = vmatprep.subr.bf16.mxu0 0
    %421 = vmatpush1.bf16.msra.mxu0 0
    %422 = vmatprep.subr.bf16.mxu0 0
    %423 = vmatpush1.bf16.msra.mxu0 0
    %424 = vmatprep.subr.bf16.mxu0 0
    %425 = vmatpush1.bf16.msra.mxu0 0
    %426 = vmatprep.subr.bf16.mxu0 0
    %427 = vmatpush1.bf16.msra.mxu0 0
    %428 = vmatprep.subr.bf16.mxu0 0
    %429 = vmatpush1.bf16.msra.mxu0 0
    %430 = vmatprep.mubr.bf16.mxu0 0
    %431 = vmatmul.mubr.bf16.gmra.mrb[0].mxu0 %v396
    %v432 = vpop.f32.mrb[0].mxu0
    %v433 = vadd.f32 %v380, %v432
    %v434 = vpop.f32.mrb[0].mxu0
    %v435 = vpop.f32.mrb[0].mxu0
    %v436 = vpop.f32.mrb[0].mxu0
    %437 = vdwg.mxu0
    %v438 = vtanh.pop %v433
    %v439 = vpack.c.bf16 %v438, %v438
    %v440 = vld [vmem:[#allocation5] sm:$0xff]
    %v441 = vld [vmem:[#allocation5 + $0x8] sm:$0xff]
    %v442 = vld [vmem:[#allocation5 + $0x10] sm:$0xff]
    %v443 = vld [vmem:[#allocation5 + $0x18] sm:$0xff]
    %v444 = vld [vmem:[#allocation5 + $0x20] sm:$0xff]
    %v445 = vld [vmem:[#allocation5 + $0x28] sm:$0xff]
    %v446 = vld [vmem:[#allocation5 + $0x30] sm:$0xff]
    %v447 = vld [vmem:[#allocation5 + $0x38] sm:$0xff]
    %v448 = vld [vmem:[#allocation5 + $0x40] sm:$0xff]
    %v449 = vld [vmem:[#allocation5 + $0x48] sm:$0xff]
    %v450 = vld [vmem:[#allocation5 + $0x50] sm:$0xff]
    %v451 = vld [vmem:[#allocation5 + $0x58] sm:$0xff]
    %v452 = vld [vmem:[#allocation5 + $0x60] sm:$0xff]
    %v453 = vld [vmem:[#allocation5 + $0x68] sm:$0xff]
    %v454 = vld [vmem:[#allocation5 + $0x70] sm:$0xff]
    %v455 = vld [vmem:[#allocation5 + $0x78] sm:$0xff]
    %v456 = vld [vmem:[#allocation5 + $0x80] sm:$0xff]
    %v457 = vld [vmem:[#allocation5 + $0x88] sm:$0xff]
    %v458 = vld [vmem:[#allocation5 + $0x90] sm:$0xff]
    %v459 = vld [vmem:[#allocation5 + $0x98] sm:$0xff]
    %v460 = vld [vmem:[#allocation5 + $0xa0] sm:$0xff]
    %v461 = vld [vmem:[#allocation5 + $0xa8] sm:$0xff]
    %v462 = vld [vmem:[#allocation5 + $0xb0] sm:$0xff]
    %v463 = vld [vmem:[#allocation5 + $0xb8] sm:$0xff]
    %v464 = vld [vmem:[#allocation5 + $0xc0] sm:$0xff]
    %v465 = vld [vmem:[#allocation5 + $0xc8] sm:$0xff]
    %v466 = vld [vmem:[#allocation5 + $0xd0] sm:$0xff]
    %v467 = vld [vmem:[#allocation5 + $0xd8] sm:$0xff]
    %v468 = vld [vmem:[#allocation5 + $0xe0] sm:$0xff]
    %v469 = vld [vmem:[#allocation5 + $0xe8] sm:$0xff]
    %v470 = vld [vmem:[#allocation5 + $0xf0] sm:$0xff]
    %v471 = vld [vmem:[#allocation5 + $0xf8] sm:$0xff]
    %v472 = vld [vmem:[%s9] sm:$0xf]
    %v474 = vlaneseq
    %v475 = vshrl.u32 %v474, 7
    %v476 = vsub.s32 0, %v475
    %v477 = vrot.slane %v472, %v476
    %v478 = vlaneseq
    %v479 = vshrl.u32 %v478, 7
    %v480 = vsub.s32 1, %v479
    %v481 = vrot.slane %v472, %v480
    %v482 = vlaneseq
    %v483 = vshrl.u32 %v482, 7
    %v484 = vsub.s32 2, %v483
    %v485 = vrot.slane %v472, %v484
    %v486 = vlaneseq
    %v487 = vshrl.u32 %v486, 7
    %v488 = vsub.s32 3, %v487
    %v489 = vrot.slane %v472, %v488
    %v526 = vunpack.c.l.b16 %v440
    %v527 = vunpack.c.h.b16 %v440
    %v528 = vunpack.c.l.b16 %v441
    %v529 = vunpack.c.h.b16 %v441
    %v530 = vunpack.c.l.b16 %v442
    %v531 = vunpack.c.h.b16 %v442
    %v532 = vunpack.c.l.b16 %v443
    %v533 = vunpack.c.h.b16 %v443
    %v534 = vunpack.c.l.b16 %v444
    %v535 = vunpack.c.h.b16 %v444
    %v536 = vunpack.c.l.b16 %v445
    %v537 = vunpack.c.h.b16 %v445
    %v538 = vunpack.c.l.b16 %v446
    %v539 = vunpack.c.h.b16 %v446
    %v540 = vunpack.c.l.b16 %v447
    %v541 = vunpack.c.h.b16 %v447
    %v542 = vunpack.c.l.b16 %v448
    %v543 = vunpack.c.h.b16 %v448
    %v544 = vunpack.c.l.b16 %v449
    %v545 = vunpack.c.h.b16 %v449
    %v546 = vunpack.c.l.b16 %v450
    %v547 = vunpack.c.h.b16 %v450
    %v548 = vunpack.c.l.b16 %v451
    %v549 = vunpack.c.h.b16 %v451
    %v550 = vunpack.c.l.b16 %v452
    %v551 = vunpack.c.h.b16 %v452
    %v552 = vunpack.c.l.b16 %v453
    %v553 = vunpack.c.h.b16 %v453
    %v554 = vunpack.c.l.b16 %v454
    %v555 = vunpack.c.h.b16 %v454
    %v556 = vunpack.c.l.b16 %v455
    %v557 = vunpack.c.h.b16 %v455
    %v558 = vunpack.c.l.b16 %v456
    %v559 = vunpack.c.h.b16 %v456
    %v560 = vunpack.c.l.b16 %v457
    %v561 = vunpack.c.h.b16 %v457
    %v562 = vunpack.c.l.b16 %v458
    %v563 = vunpack.c.h.b16 %v458
    %v564 = vunpack.c.l.b16 %v459
    %v565 = vunpack.c.h.b16 %v459
    %v566 = vunpack.c.l.b16 %v460
    %v567 = vunpack.c.h.b16 %v460
    %v568 = vunpack.c.l.b16 %v461
    %v569 = vunpack.c.h.b16 %v461
    %v570 = vunpack.c.l.b16 %v462
    %v571 = vunpack.c.h.b16 %v462
    %v572 = vunpack.c.l.b16 %v463
    %v573 = vunpack.c.h.b16 %v463
    %v574 = vunpack.c.l.b16 %v464
    %v575 = vunpack.c.h.b16 %v464
    %v576 = vunpack.c.l.b16 %v465
    %v577 = vunpack.c.h.b16 %v465
    %v578 = vunpack.c.l.b16 %v466
    %v579 = vunpack.c.h.b16 %v466
    %v580 = vunpack.c.l.b16 %v467
    %v581 = vunpack.c.h.b16 %v467
    %v582 = vunpack.c.l.b16 %v468
    %v583 = vunpack.c.h.b16 %v468
    %v584 = vunpack.c.l.b16 %v469
    %v585 = vunpack.c.h.b16 %v469
    %v586 = vunpack.c.l.b16 %v470
    %v587 = vunpack.c.h.b16 %v470
    %v588 = vunpack.c.l.b16 %v471
    %v589 = vunpack.c.h.b16 %v471
    %v590 = vpack.c.b16 %v530, %v526
    %v591 = vpack.c.b16 %v531, %v527
    %v592 = vpack.c.b16 %v532, %v528
    %v593 = vpack.c.b16 %v533, %v529
    %v594 = vpack.c.b16 %v538, %v534
    %v595 = vpack.c.b16 %v539, %v535
    %v596 = vpack.c.b16 %v540, %v536
    %v597 = vpack.c.b16 %v541, %v537
    %v598 = vpack.c.b16 %v546, %v542
    %v599 = vpack.c.b16 %v547, %v543
    %v600 = vpack.c.b16 %v548, %v544
    %v601 = vpack.c.b16 %v549, %v545
    %v602 = vpack.c.b16 %v554, %v550
    %v603 = vpack.c.b16 %v555, %v551
    %v604 = vpack.c.b16 %v556, %v552
    %v605 = vpack.c.b16 %v557, %v553
    %v606 = vpack.c.b16 %v562, %v558
    %v607 = vpack.c.b16 %v563, %v559
    %v608 = vpack.c.b16 %v564, %v560
    %v609 = vpack.c.b16 %v565, %v561
    %v610 = vpack.c.b16 %v570, %v566
    %v611 = vpack.c.b16 %v571, %v567
    %v612 = vpack.c.b16 %v572, %v568
    %v613 = vpack.c.b16 %v573, %v569
    %v614 = vpack.c.b16 %v578, %v574
    %v615 = vpack.c.b16 %v579, %v575
    %v616 = vpack.c.b16 %v580, %v576
    %v617 = vpack.c.b16 %v581, %v577
    %v618 = vpack.c.b16 %v586, %v582
    %v619 = vpack.c.b16 %v587, %v583
    %v620 = vpack.c.b16 %v588, %v584
    %v621 = vpack.c.b16 %v589, %v585
    %654 = vmatprep.subr.bf16.mxu0 %v591
    %655 = vmatpush1.bf16.msra.mxu0 %v590
    %656 = vmatprep.subr.bf16.mxu0 %v595
    %657 = vmatpush1.bf16.msra.mxu0 %v594
    %658 = vmatprep.subr.bf16.mxu0 %v599
    %659 = vmatpush1.bf16.msra.mxu0 %v598
    %660 = vmatprep.subr.bf16.mxu0 %v603
    %661 = vmatpush1.bf16.msra.mxu0 %v602
    %662 = vmatprep.subr.bf16.mxu0 %v607
    %663 = vmatpush1.bf16.msra.mxu0 %v606
    %664 = vmatprep.subr.bf16.mxu0 %v611
    %665 = vmatpush1.bf16.msra.mxu0 %v610
    %666 = vmatprep.subr.bf16.mxu0 %v615
    %667 = vmatpush1.bf16.msra.mxu0 %v614
    %668 = vmatprep.subr.bf16.mxu0 %v619
    %669 = vmatpush1.bf16.msra.mxu0 %v618
    %670 = vmatprep.subr.bf16.mxu0 0
    %671 = vmatpush1.bf16.msra.mxu0 0
    %672 = vmatprep.subr.bf16.mxu0 0
    %673 = vmatpush1.bf16.msra.mxu0 0
    %674 = vmatprep.subr.bf16.mxu0 0
    %675 = vmatpush1.bf16.msra.mxu0 0
    %676 = vmatprep.subr.bf16.mxu0 0
    %677 = vmatpush1.bf16.msra.mxu0 0
    %678 = vmatprep.subr.bf16.mxu0 0
    %679 = vmatpush1.bf16.msra.mxu0 0
    %680 = vmatprep.subr.bf16.mxu0 0
    %681 = vmatpush1.bf16.msra.mxu0 0
    %682 = vmatprep.subr.bf16.mxu0 0
    %683 = vmatpush1.bf16.msra.mxu0 0
    %684 = vmatprep.subr.bf16.mxu0 0
    %685 = vmatpush1.bf16.msra.mxu0 0
    %686 = vmatprep.mubr.bf16.mxu0 0
    %687 = vmatmul.mubr.bf16.gmra.mrb[0].mxu0 %v439
    %v688 = vpop.f32.mrb[0].mxu0
    %v689 = vadd.f32 %v477, %v688
    %v690 = vpop.f32.mrb[0].mxu0
    %v691 = vadd.f32 %v481, %v690
    %v692 = vpop.f32.mrb[0].mxu0
    %v693 = vpop.f32.mrb[0].mxu0
    %694 = vdwg.mxu0
    %695 = vmatprep.subr.bf16.mxu0 %v593
    %696 = vmatpush1.bf16.msra.mxu0 %v592
    %697 = vmatprep.subr.bf16.mxu0 %v597
    %698 = vmatpush1.bf16.msra.mxu0 %v596
    %699 = vmatprep.subr.bf16.mxu0 %v601
    %700 = vmatpush1.bf16.msra.mxu0 %v600
    %701 = vmatprep.subr.bf16.mxu0 %v605
    %702 = vmatpush1.bf16.msra.mxu0 %v604
    %703 = vmatprep.subr.bf16.mxu0 %v609
    %704 = vmatpush1.bf16.msra.mxu0 %v608
    %705 = vmatprep.subr.bf16.mxu0 %v613
    %706 = vmatpush1.bf16.msra.mxu0 %v612
    %707 = vmatprep.subr.bf16.mxu0 %v617
    %708 = vmatpush1.bf16.msra.mxu0 %v616
    %709 = vmatprep.subr.bf16.mxu0 %v621
    %710 = vmatpush1.bf16.msra.mxu0 %v620
    %711 = vmatprep.subr.bf16.mxu0 0
    %712 = vmatpush1.bf16.msra.mxu0 0
    %713 = vmatprep.subr.bf16.mxu0 0
    %714 = vmatpush1.bf16.msra.mxu0 0
    %715 = vmatprep.subr.bf16.mxu0 0
    %716 = vmatpush1.bf16.msra.mxu0 0
    %717 = vmatprep.subr.bf16.mxu0 0
    %718 = vmatpush1.bf16.msra.mxu0 0
    %719 = vmatprep.subr.bf16.mxu0 0
    %720 = vmatpush1.bf16.msra.mxu0 0
    %721 = vmatprep.subr.bf16.mxu0 0
    %722 = vmatpush1.bf16.msra.mxu0 0
    %723 = vmatprep.subr.bf16.mxu0 0
    %724 = vmatpush1.bf16.msra.mxu0 0
    %725 = vmatprep.subr.bf16.mxu0 0
    %726 = vmatpush1.bf16.msra.mxu0 0
    %727 = vmatprep.mubr.bf16.mxu0 0
    %728 = vmatmul.mubr.bf16.gmra.mrb[0].mxu0 %v439
    %v729 = vpop.f32.mrb[0].mxu0
    %v730 = vadd.f32 %v485, %v729
    %v731 = vpop.f32.mrb[0].mxu0
    %v732 = vadd.f32 %v489, %v731
    %v733 = vpop.f32.mrb[0].mxu0
    %v734 = vpop.f32.mrb[0].mxu0
    %735 = vdwg.mxu0
    %736 = vst [vmem:[#allocation7] sm:$0xff] %v689
    %737 = vst [vmem:[#allocation7 + $0x8] sm:$0xff] %v691
    %738 = vst [vmem:[#allocation7 + $0x10] sm:$0xff] %v730
    %739 = vst [vmem:[#allocation7 + $0x18] sm:$0xff] %v732
    %741 = vrot.lane.b32.xlu0 %v355, 32
    %v742 = vpop.permute.xlu0 %741
    %v744 = vsel %vm394, %v369, %v742
    %vm745 = vcmask 785408
    %v746 = vsel %vm745, %v744, 0.0
    %747 = vst [vmem:[#allocation8] sm:$0xff] %v746
    // Predicated region
    $region50: #{tpu_custom_call.1} parent=1 // pred_check
      _
    $region51: #{tpu_custom_call.1} parent=1 // pred_check_branch
      %749 = sbr.rel (0) target = $region53
    $region52: #{tpu_custom_call.1} parent=1 // pred_region
      %s751 = ssub.s32 512, 512
      %752 = vsyncadd [#allocation4], %s751
      %s754 = sshll.u32 [#allocation7], 4
      %s755 = int_to_ptr.vmem [resolvable:$true] %s754
      %757 = dma.vmem_to_hbm [thread:$0]  %s755, 512, %s10, [#allocation4]
    $region53: #{tpu_custom_call.1} parent=1 // pred_fallthru
      _
    // Predicated region
    $region54: #{tpu_custom_call.1} parent=1 // pred_check
      _
    $region55: #{tpu_custom_call.1} parent=1 // pred_check_branch
      %759 = sbr.rel (0) target = $region57
    $region56: #{tpu_custom_call.1} parent=1 // pred_region
      %s761 = ssub.s32 128, 128
      %762 = vsyncadd [#allocation9], %s761
      %s764 = sshll.u32 [#allocation8], 4
      %s765 = int_to_ptr.vmem [resolvable:$true] %s764
      %767 = dma.vmem_to_hbm [thread:$0]  %s765, 128, %s11, [#allocation9]
    $region57: #{tpu_custom_call.1} parent=1 // pred_fallthru
      _
    // Predicated region
    $region58: #{tpu_custom_call.1} parent=1 // pred_check
      _
    $region59: #{tpu_custom_call.1} parent=1 // pred_check_branch
      %769 = sbr.rel (0) target = $region61
    $region60: #{tpu_custom_call.1} parent=1 // pred_region
      %770 = dma.done [#allocation4], 512
    $region61: #{tpu_custom_call.1} parent=1 // pred_fallthru
      _
    // Predicated region
    $region62: #{tpu_custom_call.1} parent=1 // pred_check
      _
    $region63: #{tpu_custom_call.1} parent=1 // pred_check_branch
      %772 = sbr.rel (0) target = $region65
    $region64: #{tpu_custom_call.1} parent=1 // pred_region
      %773 = dma.done [#allocation9], 128
    $region65: #{tpu_custom_call.1} parent=1 // pred_fallthru
      _
    %774 = vsyncpa [#allocation3], 1
    %775 = vsyncpa [#allocation6], 1
    %776 = vsyncpa [#allocation4], 1
    %777 = vsyncpa [#allocation9], 1

</llo_original>
